<compile_context>
chip_gen: v7x
topology: tpu7x:2x2x1
jax: 0.10.0
libtpu: 0.0.40
codegen_flags: <defaults>
</compile_context>

<pallas_src>
import functools

import jax
import jax.numpy as jnp
from jax.experimental import pallas as pl
from jax.experimental.pallas import tpu as pltpu


# ---------------------------------------------------------------------------
# Pallas kernel: fused factorization-machine interaction for one batch tile
# ---------------------------------------------------------------------------
def _fm_kernel(reduce_sum, x_ref, o_ref):
    # x_ref: (TB, F, D) block; reductions over the field axis (sublane-side) and,
    # optionally, the embedding axis (lane-side) all stay in VMEM/vregs.
    x = x_ref[...].astype(jnp.float32)
    s = jnp.sum(x, axis=1)                       # (TB, D)  sum over fields
    ix = s * s - jnp.sum(x * x, axis=1)          # (TB, D)
    if reduce_sum:
        out = 0.5 * jnp.sum(ix, axis=1, keepdims=True)   # (TB, 1)
    else:
        out = 0.5 * ix                                   # (TB, D)
    o_ref[...] = out.astype(o_ref.dtype)


def factorization_machine(x, reduce_sum=True, block_b=None):
    """Pallas FM forward. x: (B, F, D) -> (B, 1) if reduce_sum else (B, D)."""
    B, F, D = x.shape

    # Pick a batch tile: either a divisor of B that is a multiple of 8 (legal as a
    # non-full second-to-last output dim), or just the full batch (full-dim blocks are
    # always legal). No padding copies are made either way.
    if block_b is None or block_b >= B or B % block_b != 0 or block_b % 8 != 0:
        block_b = B
    grid = (B // block_b,)

    if reduce_sum:
        out_shape = jax.ShapeDtypeStruct((B, 1), x.dtype)
        out_spec = pl.BlockSpec((block_b, 1), lambda i: (i, 0))
    else:
        out_shape = jax.ShapeDtypeStruct((B, D), x.dtype)
        out_spec = pl.BlockSpec((block_b, D), lambda i: (i, 0))

    return pl.pallas_call(
        functools.partial(_fm_kernel, reduce_sum),
        out_shape=out_shape,
        grid=grid,
        in_specs=[pl.BlockSpec((block_b, F, D), lambda i: (i, 0, 0))],
        out_specs=out_spec,
        compiler_params=pltpu.CompilerParams(
            dimension_semantics=("parallel",)
        ),
    )(x)


# ---------------------------------------------------------------------------
# Pure-JAX reference (mirrors the PyTorch forward exactly)
# ---------------------------------------------------------------------------
def fm_reference(x, reduce_sum=True):
    x = x.astype(jnp.float32)
    square_of_sum = jnp.sum(x, axis=1) ** 2
    sum_of_square = jnp.sum(x ** 2, axis=1)
    ix = square_of_sum - sum_of_square
    if reduce_sum:
        ix = jnp.sum(ix, axis=1, keepdims=True)
    return 0.5 * ix


if __name__ == "__main__":
    key = jax.random.PRNGKey(0)

    # Small shapes consistent with the module: (batch, num_fields, embed_dim)
    B, F, D = 2, 4, 32
    x = jax.random.normal(key, (B, F, D), jnp.float32)

    # reduce_sum=True (module default)
    out = factorization_machine(x, reduce_sum=True)
    jax.block_until_ready(out)
    ref = fm_reference(x, reduce_sum=True)
    assert out.shape == (B, 1), out.shape
    assert bool(jnp.all(jnp.isfinite(out)))
    assert bool(jnp.allclose(out, ref, rtol=1e-5, atol=1e-5)), (out, ref)

    # reduce_sum=False branch of the same forward
    out_nr = factorization_machine(x, reduce_sum=False)
    jax.block_until_ready(out_nr)
    ref_nr = fm_reference(x, reduce_sum=False)
    assert out_nr.shape == (B, D), out_nr.shape
    assert bool(jnp.allclose(out_nr, ref_nr, rtol=1e-5, atol=1e-5))

    # Larger case exercising the batch-tiled grid (grid=(2,), parallel batch blocks).
    key2 = jax.random.PRNGKey(1)
    xb = jax.random.normal(key2, (16, 8, 128), jnp.float32)
    out_b = factorization_machine(xb, reduce_sum=True, block_b=8)
    jax.block_until_ready(out_b)
    ref_b = fm_reference(xb, reduce_sum=True)
    assert out_b.shape == (16, 1)
    assert bool(jnp.allclose(out_b, ref_b, rtol=1e-5, atol=1e-4))

    print("KERNEL_OK")
</pallas_src>

<mosaic_0001>
module attributes {stable_mosaic.version = 11 : i64} {
  func.func @_fm_kernel(%arg0: i32, %arg1: memref<2x4x32xf32, #tpu.memory_space<vmem>>, %arg2: memref<2x1xf32, #tpu.memory_space<vmem>>) attributes {dimension_semantics = [#tpu.dimension_semantics<parallel>], iteration_bounds = array<i64: 1>, scalar_prefetch = 0 : i64, scratch_operands = 0 : i64, tpu.core_type = #tpu.core_type<tc>, window_params = [{transform_indices = @transform_0, window_bounds = array<i64: 2, 4, 32>}, {transform_indices = @transform_1, window_bounds = array<i64: 2, 1>}]} {
    %c0 = arith.constant 0 : index
    %c0_0 = arith.constant 0 : index
    %c0_1 = arith.constant 0 : index
    %0 = vector.load %arg1[%c0, %c0_0, %c0_1] : memref<2x4x32xf32, #tpu.memory_space<vmem>>, vector<2x4x32xf32>
    %cst = arith.constant dense<0.000000e+00> : vector<2x32xf32>
    %1 = vector.multi_reduction <add>, %0, %cst [1] : vector<2x4x32xf32> to vector<2x32xf32>
    %2 = arith.mulf %1, %1 : vector<2x32xf32>
    %3 = arith.mulf %0, %0 : vector<2x4x32xf32>
    %cst_2 = arith.constant dense<0.000000e+00> : vector<2x32xf32>
    %4 = vector.multi_reduction <add>, %3, %cst_2 [1] : vector<2x4x32xf32> to vector<2x32xf32>
    %5 = arith.subf %2, %4 : vector<2x32xf32>
    %cst_3 = arith.constant dense<0.000000e+00> : vector<2xf32>
    %6 = vector.multi_reduction <add>, %5, %cst_3 [1] : vector<2x32xf32> to vector<2xf32>
    %7 = vector.shape_cast %6 : vector<2xf32> to vector<2x1xf32>
    %cst_4 = arith.constant 5.000000e-01 : f32
    %8 = vector.broadcast %cst_4 : f32 to vector<2x1xf32>
    %9 = arith.mulf %8, %7 : vector<2x1xf32>
    %c0_5 = arith.constant 0 : index
    %c0_6 = arith.constant 0 : index
    %10 = vector.load %arg2[%c0_5, %c0_6] : memref<2x1xf32, #tpu.memory_space<vmem>>, vector<2x1xf32>
    tpu.vector_store %arg2[%c0_5, %c0_6], %9 {strides = array<i32>} : memref<2x1xf32, #tpu.memory_space<vmem>>, vector<2x1xf32>,
    return
  }
  func.func @transform_0(%arg0: i32) -> (i32, i32, i32) {
    %c0_i32 = arith.constant 0 : i32
    %c0_i32_0 = arith.constant 0 : i32
    %c0_i32_1 = arith.constant 0 : i32
    return %arg0, %c0_i32, %c0_i32_0 : i32, i32, i32
  }
  func.func @transform_1(%arg0: i32) -> (i32, i32) {
    %c0_i32 = arith.constant 0 : i32
    %c0_i32_0 = arith.constant 0 : i32
    return %arg0, %c0_i32 : i32, i32
  }
}

</mosaic_0001>

<llo_original>
// kernel: tpu_custom_call.1
$region0: #{tpu_custom_call.1}
  #allocation0 [shape = 'u32[]', space=smem, size = 0x4, offset = 0x4, fixed_abs, tag = 'smem constant byte address 0x4 - core index']
  #allocation1 [shape = 'u32[144,128]{1,0:T(1,128)}', space=vmem, size = 0x12000, scoped, tag = 'internal scratch']
  %s0 = inlined_call_operand.hbm [shape: f32[2,4,32], index: 0, kind: input, shape index: {}]
  %s1 = inlined_call_operand.vmem [shape: f32[2,1], index: 1, kind: output, shape index: {}]
  %s2 = sld [smem:[#allocation0]]
  $region18: #{tpu_custom_call.1} parent=0
    _
  %s4 = ssub.s32 1, %s2
  %s5 = scalar_select 0, %s4, %s2
  $region1: #{tpu_custom_call.1} parent=0
    #allocation2 [shape = 'u8[4096]{0}', space=vmem, size = 0x1000, scoped, tag = 'input window, operand 0, single buffered']
    #allocation3 [shape = 's32[1]{0}', space=sflag, size = 0x4, scoped, tag = 'scoped memory for tpu_custom_call.1']
    %6 = vsyncpa [#allocation3], 0
    // Predicated region
    $region2: #{tpu_custom_call.1} parent=1 // pred_check
      _
    $region3: #{tpu_custom_call.1} parent=1 // pred_check_branch
      %8 = sbr.rel (0) target = $region5
    $region4: #{tpu_custom_call.1} parent=1 // pred_region
      %s10 = ssub.s32 128, 128
      %11 = vsyncadd [#allocation3], %s10
      %s12 = sshll.u32 [#allocation2], 4
      %s13 = int_to_ptr.vmem [resolvable:$true] %s12
      %18 = dma.hbm_to_vmem [thread:$0]  %s0, 128, %s13, [#allocation3], 64, 64, 4
    $region5: #{tpu_custom_call.1} parent=1 // pred_fallthru
      _
    // Predicated region
    $region6: #{tpu_custom_call.1} parent=1 // pred_check
      _
    $region7: #{tpu_custom_call.1} parent=1 // pred_check_branch
      %20 = sbr.rel (0) target = $region9
    $region8: #{tpu_custom_call.1} parent=1 // pred_region
      %21 = dma.done [#allocation3], 128
    $region9: #{tpu_custom_call.1} parent=1 // pred_fallthru
      _
    %v22 = vld [vmem:[#allocation2] sm:$0xf]
    %v23 = vld [vmem:[#allocation2 + $0x4] sm:$0xf]
    %vm24 = vcmask 257024
    %v25 = vsel %vm24, %v22, 0.0
    %v26 = vrot.slane %v25, 4
    %v27 = vadd.f32 %v25, %v26
    %v28 = vrot.slane %v27, 2
    %v29 = vadd.f32 %v27, %v28
    %v30 = vrot.slane %v29, 1
    %v31 = vadd.f32 %v29, %v30
    %v32 = vsel %vm24, %v23, 0.0
    %v33 = vrot.slane %v32, 4
    %v34 = vadd.f32 %v32, %v33
    %v35 = vrot.slane %v34, 2
    %v36 = vadd.f32 %v34, %v35
    %v37 = vrot.slane %v36, 1
    %v38 = vadd.f32 %v36, %v37
    %v39 = vmul.f32 %v31, %v31
    %v40 = vmul.f32 %v38, %v38
    %v41 = vmul.f32 %v22, %v22
    %v42 = vmul.f32 %v23, %v23
    %v43 = vsel %vm24, %v41, 0.0
    %v44 = vrot.slane %v43, 4
    %v45 = vadd.f32 %v43, %v44
    %v46 = vrot.slane %v45, 2
    %v47 = vadd.f32 %v45, %v46
    %v48 = vrot.slane %v47, 1
    %v49 = vadd.f32 %v47, %v48
    %v50 = vsel %vm24, %v42, 0.0
    %v51 = vrot.slane %v50, 4
    %v52 = vadd.f32 %v50, %v51
    %v53 = vrot.slane %v52, 2
    %v54 = vadd.f32 %v52, %v53
    %v55 = vrot.slane %v54, 1
    %v56 = vadd.f32 %v54, %v55
    %v57 = vsub.f32 %v39, %v49
    %v58 = vsub.f32 %v40, %v56
    %vm61 = vcmask 1041409
    %v62 = vsel %vm61, %v58, %v57
    %vm64 = vcmask 254976
    %v65 = vsel %vm64, %v62, 0.0
    %66 = vadd.xlane.f32.xlu0 %v65
    %v67 = vpop.xlane.xlu0 %66
    %v68 = vmul.f32 %v67, 0.5
    %vm69 = vcmask 1024
    %70 = vst.msk [vmem:[%s1] sm:$0x3] %vm69, %v68
    // Predicated region
    $region10: #{tpu_custom_call.1} parent=1 // pred_check
      _
    $region11: #{tpu_custom_call.1} parent=1 // pred_check_branch
      %72 = sbr.rel (0) target = $region13
    $region12: #{tpu_custom_call.1} parent=1 // pred_region
      _
    $region13: #{tpu_custom_call.1} parent=1 // pred_fallthru
      _
    // Predicated region
    $region14: #{tpu_custom_call.1} parent=1 // pred_check
      _
    $region15: #{tpu_custom_call.1} parent=1 // pred_check_branch
      %74 = sbr.rel (0) target = $region17
    $region16: #{tpu_custom_call.1} parent=1 // pred_region
      _
    $region17: #{tpu_custom_call.1} parent=1 // pred_fallthru
      _
    %75 = vsyncpa [#allocation3], 1

</llo_original>
